<compile_context>
chip_gen: v7x
topology: tpu7x:2x2x1
jax: 0.10.0
libtpu: 0.0.40
codegen_flags: <defaults>
</compile_context>

<pallas_src>
import math

import jax
import jax.numpy as jnp
from jax import lax
from jax.experimental import pallas as pl
from jax.experimental.pallas import tpu as pltpu


def _round_up(x, m):
    return (x + m - 1) // m * m


def _vmem_capacity_bytes():
    """Per-core VMEM capacity; conservative fallback = 64 MiB (v7x per-TC)."""
    try:
        return int(pltpu.get_tpu_info().vmem_capacity_bytes)
    except Exception:
        return 64 * 1024 * 1024


def _resident_spec(shape):
    """Constant-index (VMEM-resident) BlockSpec, single-buffered when supported."""
    index_map = lambda i: tuple(0 for _ in shape)
    try:
        return pl.BlockSpec(shape, index_map, pipeline_mode=pl.Buffered(1))
    except (AttributeError, TypeError):   # older BlockSpec without pipeline_mode
        return pl.BlockSpec(shape, index_map)


def _images_per_step(batch, seq, k_dim, e_pad, out_itemsize, vmem_budget):
    """Images per grid step r: r*seq rows are sublane(8)-aligned (or span the whole
    array), the step's working set fits the VMEM budget, and the grid has >= 2 steps
    whenever alignment allows (v7x megacore)."""
    resident = k_dim * e_pad * 2 + seq * e_pad * 4            # weight + additive table
    # Per matmul row: 2x-buffered bf16 patch stream, 2x-buffered output stream,
    # f32 additive-table scratch, f32 accumulator temporary.
    per_row = 2 * k_dim * 2 + 2 * e_pad * out_itemsize + 2 * e_pad * 4
    max_rows = max((vmem_budget - resident - (2 << 20)) // per_row, seq)
    target_rows = min(4096, max_rows)                         # review: 2048-4096 rows

    a = 8 // math.gcd(seq, 8)          # smallest image group with 8-aligned row count
    r = max(a, (target_rows // seq) // a * a)
    if batch <= r:
        # Small batch: split into >=2 full aligned steps if that divides evenly
        # (v7x megacore), otherwise one step spanning every row (block == full array
        # dims, so no sublane-alignment constraint and no wasted padded rows).
        half = (batch // 2) // a * a
        if half >= a and batch % half == 0:
            return half
        # TODO(synk): tiny batches (e.g. the demo's B=2) run as one grid step, so one
        # v7x TensorCore idles; alignment (seq odd) makes a 2-way split not worth it.
        return batch
    while r > a and (batch + r - 1) // r < 2:                 # prefer >= 2 grid steps
        r -= a
    return r


def patch_embedding(x, conv_w, conv_b, cls_token, positions, patch_size,
                    out_dtype=None):
    """x: (B, C, H, W).  Returns (B, num_patches + 1, E), matching the PyTorch module."""
    b, c, h, w = x.shape
    p = patch_size
    nh, nw = h // p, w // p
    num_patches = nh * nw
    seq = num_patches + 1
    emb = conv_w.shape[0]
    k = c * p * p
    out_dtype = x.dtype if out_dtype is None else out_dtype
    out_itemsize = jnp.dtype(out_dtype).itemsize

    # Pad the embedding (lane) dim to a multiple of 128 when misaligned: full MXU
    # columns and unmasked vector stores (matters most on v5e).  Sliced off after.
    e_pad = emb if emb % 128 == 0 else _round_up(emb, 128)

    vmem_cap = _vmem_capacity_bytes()
    vmem_budget = min(int(vmem_cap * 0.75), 100 * 1024 * 1024)
    r = _images_per_step(b, seq, k, e_pad, out_itemsize, vmem_budget)
    tm = r * seq                                  # matmul rows per grid step
    num_steps = (b + r - 1) // r                  # cdiv; tail block is edge-masked
    total_rows = b * seq

    # Patch extraction (stride == kernel conv) + one zero "cls patch" row per image so
    # the matmul covers all seq rows and the kernel's output store is one dense block.
    patches = (
        x.reshape(b, c, nh, p, nw, p)
        .transpose(0, 2, 4, 1, 3, 5)              # (b, nh, nw, c, p, p)
        .reshape(b, num_patches, k)
    )
    patches = jnp.concatenate(
        [jnp.zeros((b, 1, k), patches.dtype), patches], axis=1)      # cls row = 0
    patches = patches.reshape(total_rows, k).astype(jnp.bfloat16)    # bf16 MXU operand

    w2 = conv_w.reshape(emb, k).T.astype(jnp.bfloat16)               # (K, E) bf16
    # Resident additive table: row 0 = cls_token + positions[0] (no conv bias),
    # row 1+j = positions[1+j] + conv_b.  Kept f32 so the adds stay full precision.
    table = jnp.concatenate(
        [cls_token.reshape(1, emb).astype(jnp.float32)
         + positions[0:1].astype(jnp.float32),
         positions[1:].astype(jnp.float32)
         + conv_b.reshape(1, emb).astype(jnp.float32)],
        axis=0)                                                      # (seq, E) f32
    if e_pad != emb:
        w2 = jnp.pad(w2, ((0, 0), (0, e_pad - emb)))
        table = jnp.pad(table, ((0, 0), (0, e_pad - emb)))

    def kernel(patches_ref, w_ref, table_ref, out_ref, add_scr):
        # Tile the (seq, E) additive table across this step's r images into VMEM
        # scratch.  It is refilled every step (cheap VMEM stores, hidden under the
        # HBM-bound step) rather than gated on program_id == 0, so it stays correct
        # when the "parallel" grid axis is sharded across v7x's two TensorCores
        # (a core may never execute step 0).
        def fill(i, carry):
            add_scr[pl.ds(i * seq, seq), :] = table_ref[...]
            return carry
        lax.fori_loop(0, r, fill, 0)

        acc = jnp.dot(patches_ref[...], w_ref[...],
                      preferred_element_type=jnp.float32)            # (tm, E) f32
        out_ref[...] = (acc + add_scr[...]).astype(out_ref.dtype)    # dense 2-D store

    est = (2 * tm * k * 2                       # double-buffered bf16 patch stream
           + 2 * tm * e_pad * out_itemsize      # double-buffered output stream
           + 2 * tm * e_pad * 4                 # additive scratch + f32 acc temp
           + k * e_pad * 2 + seq * e_pad * 4)   # resident weight + table
    vmem_limit = int(min(max(est + est // 4, 16 * 1024 * 1024),
                         vmem_cap - 4 * 1024 * 1024))

    out2d = pl.pallas_call(
        kernel,
        out_shape=jax.ShapeDtypeStruct((total_rows, e_pad), out_dtype),
        grid=(num_steps,),
        in_specs=[
            pl.BlockSpec((tm, k), lambda i: (i, 0)),    # streamed patch tile
            _resident_spec((k, e_pad)),                 # resident weight (1 buffer)
            _resident_spec((seq, e_pad)),               # resident additive table
        ],
        out_specs=pl.BlockSpec((tm, e_pad), lambda i: (i, 0)),
        scratch_shapes=[pltpu.VMEM((tm, e_pad), jnp.float32)],
        compiler_params=pltpu.CompilerParams(
            dimension_semantics=("parallel",),
            vmem_limit_bytes=vmem_limit,
        ),
    )(patches, w2, table)

    out2d = out2d[:, :emb] if e_pad != emb else out2d
    return out2d.reshape(b, seq, emb)    # leading-dim split: metadata-only reshape


if __name__ == "__main__":
    # Small shapes consistent with the module: in_channels=4, patch_size=4,
    # emb_size=32, img_size=16 -> num_patches = (16/4)^2 = 16, seq = 17.
    in_channels, patch_size, emb_size, img_size = 4, 4, 32, 16
    batch = 2

    key = jax.random.PRNGKey(0)
    kx, kw, kb, kc, kp = jax.random.split(key, 5)

    x = jax.random.normal(kx, (batch, in_channels, img_size, img_size), jnp.float32)
    conv_w = jax.random.normal(
        kw, (emb_size, in_channels, patch_size, patch_size), jnp.float32) * 0.02
    conv_b = jax.random.normal(kb, (emb_size,), jnp.float32) * 0.02
    cls_token = jax.random.normal(kc, (1, 1, emb_size), jnp.float32)
    positions = jax.random.normal(
        kp, ((img_size // patch_size) ** 2 + 1, emb_size), jnp.float32)

    out = patch_embedding(x, conv_w, conv_b, cls_token, positions, patch_size)
    out = jax.block_until_ready(out)

    # Pure-JAX f32 reference (kernel uses bf16 MXU operands -> loose tolerance).
    nh = img_size // patch_size
    num_patches = nh * nh
    patches_ref = (
        x.reshape(batch, in_channels, nh, patch_size, nh, patch_size)
        .transpose(0, 2, 4, 1, 3, 5)
        .reshape(batch, num_patches, in_channels * patch_size * patch_size))
    proj_ref = patches_ref @ conv_w.reshape(emb_size, -1).T + conv_b
    cls_ref = jnp.broadcast_to(cls_token, (batch, 1, emb_size))
    ref = jnp.concatenate([cls_ref, proj_ref], axis=1) + positions[None]

    assert out.shape == (batch, num_patches + 1, emb_size)
    assert jnp.allclose(out, ref, atol=3e-2, rtol=3e-2)
    print("KERNEL_OK")
</pallas_src>

<mosaic_0001>
module attributes {stable_mosaic.version = 11 : i64} {
  func.func @kernel(%arg0: i32, %arg1: memref<34x64xbf16, #tpu.memory_space<vmem>>, %arg2: memref<64x128xbf16, #tpu.memory_space<vmem>>, %arg3: memref<17x128xf32, #tpu.memory_space<vmem>>, %arg4: memref<34x128xf32, #tpu.memory_space<vmem>>, %arg5: memref<34x128xf32, #tpu.memory_space<vmem>>) attributes {dimension_semantics = [#tpu.dimension_semantics<parallel>], iteration_bounds = array<i64: 1>, scalar_prefetch = 0 : i64, scratch_operands = 1 : i64, tpu.core_type = #tpu.core_type<tc>, window_params = [{transform_indices = @transform_0, window_bounds = array<i64: 34, 64>}, {pipeline_mode = #tpu.pipeline_mode<synchronous>, transform_indices = @transform_1, window_bounds = array<i64: 64, 128>}, {pipeline_mode = #tpu.pipeline_mode<synchronous>, transform_indices = @transform_2, window_bounds = array<i64: 17, 128>}, {transform_indices = @transform_3, window_bounds = array<i64: 34, 128>}]} {
    %c0_i32 = arith.constant 0 : i32
    %c2_i32 = arith.constant 2 : i32
    %0 = arith.addi %c0_i32, %c2_i32 : i32
    %c1_i32 = arith.constant 1 : i32
    scf.for %arg6 = %c0_i32 to %0 step %c1_i32  : i32 {
      %c0_8 = arith.constant 0 : index
      %c0_9 = arith.constant 0 : index
      %7 = vector.load %arg3[%c0_8, %c0_9] : memref<17x128xf32, #tpu.memory_space<vmem>>, vector<17x128xf32>
      %c17_i32 = arith.constant 17 : i32
      %8 = arith.muli %arg6, %c17_i32 : i32
      %9 = arith.index_cast %8 : i32 to index
      %c0_10 = arith.constant 0 : index
      %10 = vector.load %arg5[%9, %c0_10] : memref<34x128xf32, #tpu.memory_space<vmem>>, vector<17x128xf32>
      tpu.vector_store %arg5[%9, %c0_10], %7 {strides = array<i32>} : memref<34x128xf32, #tpu.memory_space<vmem>>, vector<17x128xf32>,
    }
    %c2_i32_0 = arith.constant 2 : i32
    %c0 = arith.constant 0 : index
    %c0_1 = arith.constant 0 : index
    %1 = vector.load %arg1[%c0, %c0_1] : memref<34x64xbf16, #tpu.memory_space<vmem>>, vector<34x64xbf16>
    %c0_2 = arith.constant 0 : index
    %c0_3 = arith.constant 0 : index
    %2 = vector.load %arg2[%c0_2, %c0_3] : memref<64x128xbf16, #tpu.memory_space<vmem>>, vector<64x128xbf16>
    %cst = arith.constant dense<0.000000e+00> : vector<34x128xf32>
    %3 = tpu.matmul %1, %2, %cst {dimension_numbers = #tpu.dot_dimension_numbers<[1], [0], [0], [1], [0, 0, 1, 1], [], []>} : vector<34x64xbf16>, vector<64x128xbf16>, vector<34x128xf32> -> vector<34x128xf32>
    %c0_4 = arith.constant 0 : index
    %c0_5 = arith.constant 0 : index
    %4 = vector.load %arg5[%c0_4, %c0_5] : memref<34x128xf32, #tpu.memory_space<vmem>>, vector<34x128xf32>
    %5 = arith.addf %3, %4 : vector<34x128xf32>
    %c0_6 = arith.constant 0 : index
    %c0_7 = arith.constant 0 : index
    %6 = vector.load %arg4[%c0_6, %c0_7] : memref<34x128xf32, #tpu.memory_space<vmem>>, vector<34x128xf32>
    tpu.vector_store %arg4[%c0_6, %c0_7], %5 {strides = array<i32>} : memref<34x128xf32, #tpu.memory_space<vmem>>, vector<34x128xf32>,
    return
  }
  func.func @transform_0(%arg0: i32) -> (i32, i32) {
    %c0_i32 = arith.constant 0 : i32
    %c0_i32_0 = arith.constant 0 : i32
    return %arg0, %c0_i32 : i32, i32
  }
  func.func @transform_1(%arg0: i32) -> (i32, i32) {
    %c0_i32 = arith.constant 0 : i32
    %c0_i32_0 = arith.constant 0 : i32
    %c0_i32_1 = arith.constant 0 : i32
    return %c0_i32, %c0_i32_0 : i32, i32
  }
  func.func @transform_2(%arg0: i32) -> (i32, i32) {
    %c0_i32 = arith.constant 0 : i32
    %c0_i32_0 = arith.constant 0 : i32
    %c0_i32_1 = arith.constant 0 : i32
    return %c0_i32, %c0_i32_0 : i32, i32
  }
  func.func @transform_3(%arg0: i32) -> (i32, i32) {
    %c0_i32 = arith.constant 0 : i32
    %c0_i32_0 = arith.constant 0 : i32
    return %arg0, %c0_i32 : i32, i32
  }
}

</mosaic_0001>

<llo_original>
// kernel: tpu_custom_call.1
$region0: #{tpu_custom_call.1}
  #allocation0 [shape = 'u32[]', space=smem, size = 0x4, offset = 0x4, fixed_abs, tag = 'smem constant byte address 0x4 - core index']
  #allocation1 [shape = 'u32[144,128]{1,0:T(1,128)}', space=vmem, size = 0x12000, scoped, tag = 'internal scratch']
  #allocation2 [shape = 'f32[34,128]{1,0:T(8,128)}', space=vmem, size = 0x5000, scoped, tag = 'scratch operand']
  %s0 = inlined_call_operand.hbm [shape: bf16[34,64], index: 0, kind: input, shape index: {}]
  %s1 = inlined_call_operand.hbm [shape: bf16[64,128], index: 1, kind: input, shape index: {}]
  %s2 = inlined_call_operand.hbm [shape: f32[17,128], index: 2, kind: input, shape index: {}]
  %s3 = inlined_call_operand.hbm [shape: f32[34,128], index: 3, kind: output, shape index: {}]
  %s4 = sld [smem:[#allocation0]]
  $region41: #{tpu_custom_call.1} parent=0
    _
  %s6 = ssub.s32 1, %s4
  %s7 = scalar_select 0, %s6, %s4
  $region1: #{tpu_custom_call.1} parent=0
    #allocation3 [shape = 'u8[10240]{0}', space=vmem, size = 0x2800, scoped, tag = 'input window, operand 0, single buffered']
    #allocation4 [shape = 's32[1]{0}', space=sflag, size = 0x4, scoped, tag = 'scoped memory for tpu_custom_call.1']
    #allocation5 [shape = 's32[1]{0}', space=sflag, size = 0x4, scoped, tag = 'scoped memory for tpu_custom_call.1']
    #allocation6 [shape = 'u8[16384]{0}', space=vmem, size = 0x4000, scoped, tag = 'input window, operand 1, single buffered']
    #allocation7 [shape = 's32[1]{0}', space=sflag, size = 0x4, scoped, tag = 'scoped memory for tpu_custom_call.1']
    #allocation8 [shape = 'u8[12288]{0}', space=vmem, size = 0x3000, scoped, tag = 'input window, operand 2, single buffered']
    #allocation9 [shape = 'u8[20480]{0}', space=vmem, size = 0x5000, scoped, tag = 'output window, operand 0, single buffered']
    %8 = vsyncpa [#allocation4], 0
    %9 = vsyncpa [#allocation7], 0
    %10 = vsyncpa [#allocation5], 0
    // Predicated region
    $region2: #{tpu_custom_call.1} parent=1 // pred_check
      _
    $region3: #{tpu_custom_call.1} parent=1 // pred_check_branch
      %12 = sbr.rel (0) target = $region5
    $region4: #{tpu_custom_call.1} parent=1 // pred_region
      %s14 = ssub.s32 320, 320
      %15 = vsyncadd [#allocation4], %s14
      %s16 = sshll.u32 [#allocation3], 4
      %s17 = int_to_ptr.vmem [resolvable:$true] %s16
      %22 = dma.hbm_to_vmem [thread:$0]  %s0, 320, %s17, [#allocation4], 64, 64, 4
    $region5: #{tpu_custom_call.1} parent=1 // pred_fallthru
      _
    // Predicated region
    $region6: #{tpu_custom_call.1} parent=1 // pred_check
      _
    $region7: #{tpu_custom_call.1} parent=1 // pred_check_branch
      %24 = sbr.rel (0) target = $region9
    $region8: #{tpu_custom_call.1} parent=1 // pred_region
      %s26 = ssub.s32 512, 512
      %27 = vsyncadd [#allocation7], %s26
      %s28 = sshll.u32 [#allocation6], 4
      %s29 = int_to_ptr.vmem [resolvable:$true] %s28
      %34 = dma.hbm_to_vmem [thread:$0]  %s1, 512, %s29, [#allocation7], 64, 64, 4
    $region9: #{tpu_custom_call.1} parent=1 // pred_fallthru
      _
    // Predicated region
    $region10: #{tpu_custom_call.1} parent=1 // pred_check
      _
    $region11: #{tpu_custom_call.1} parent=1 // pred_check_branch
      %36 = sbr.rel (0) target = $region13
    $region12: #{tpu_custom_call.1} parent=1 // pred_region
      %s38 = ssub.s32 384, 384
      %39 = vsyncadd [#allocation7], %s38
      %s40 = sshll.u32 [#allocation8], 4
      %s41 = int_to_ptr.vmem [resolvable:$true] %s40
      %46 = dma.hbm_to_vmem [thread:$0]  %s2, 384, %s41, [#allocation7], 128, 128, 8
    $region13: #{tpu_custom_call.1} parent=1 // pred_fallthru
      _
    // Predicated region
    $region14: #{tpu_custom_call.1} parent=1 // pred_check
      _
    $region15: #{tpu_custom_call.1} parent=1 // pred_check_branch
      %48 = sbr.rel (0) target = $region17
    $region16: #{tpu_custom_call.1} parent=1 // pred_region
      %49 = dma.done [#allocation4], 320
    $region17: #{tpu_custom_call.1} parent=1 // pred_fallthru
      _
    // Predicated region
    $region18: #{tpu_custom_call.1} parent=1 // pred_check
      _
    $region19: #{tpu_custom_call.1} parent=1 // pred_check_branch
      %51 = sbr.rel (0) target = $region21
    $region20: #{tpu_custom_call.1} parent=1 // pred_region
      %52 = dma.done [#allocation7], 512
    $region21: #{tpu_custom_call.1} parent=1 // pred_fallthru
      _
    // Predicated region
    $region22: #{tpu_custom_call.1} parent=1 // pred_check
      _
    $region23: #{tpu_custom_call.1} parent=1 // pred_check_branch
      %54 = sbr.rel (0) target = $region25
    $region24: #{tpu_custom_call.1} parent=1 // pred_region
      %55 = dma.done [#allocation7], 384
    $region25: #{tpu_custom_call.1} parent=1 // pred_fallthru
      _
    loop: start=0, step=1, limit=2
    $region26: #{tpu_custom_call.1} parent=1 // loop_pre_header
      _
    $region27: #{tpu_custom_call.1} parent=1 // loop_header
      %s58 = sphi 0, %s62
      %p59 = scmp.ge.s32.totalorder %s58, 2
    $region28: #{tpu_custom_call.1} parent=1 // loop_header_branch
      %61 = sbr.rel (%p59) target = $region32
    $region29: #{tpu_custom_call.1} parent=1 // loop_body
      %v63 = vld [vmem:[#allocation8] sm:$0xff]
      %v64 = vld [vmem:[#allocation8 + $0x8] sm:$0xff]
      %v65 = vld [vmem:[#allocation8 + $0x10] sm:$0x1]
      %s66 = smul.u32 %s58, 17
      %s67 = scalar_lea.vmem [#allocation2], %s66
      %68 = vst [vmem:[%s67] sm:$0xff] %v63
      %69 = vst [vmem:[%s67 + $0x8] sm:$0xff] %v64
      %70 = vst [vmem:[%s67 + $0x10] sm:$0x1] %v65
    $region30: #{tpu_custom_call.1} parent=1 // loop_footer
      %s62 = sadd.s32 1, %s58
    $region31: #{tpu_custom_call.1} parent=1 // loop_footer_branch
      %57 = sbr.rel target = $region27
    $region32: #{tpu_custom_call.1} parent=1 // loop_exit
      _
    %v71 = vld [vmem:[#allocation3] sm:$0xf]
    %v72 = vld [vmem:[#allocation3 + $0x4] sm:$0xf]
    %v73 = vld [vmem:[#allocation3 + $0x8] sm:$0xf]
    %v74 = vld [vmem:[#allocation3 + $0xc] sm:$0xf]
    %v75 = vld [vmem:[#allocation3 + $0x10] sm:$0x1]
    %v76 = vld [vmem:[#allocation6] sm:$0xf]
    %v77 = vld [vmem:[#allocation6 + $0x4] sm:$0xf]
    %v78 = vld [vmem:[#allocation6 + $0x8] sm:$0xf]
    %v79 = vld [vmem:[#allocation6 + $0xc] sm:$0xf]
    %v80 = vld [vmem:[#allocation6 + $0x10] sm:$0xf]
    %v81 = vld [vmem:[#allocation6 + $0x14] sm:$0xf]
    %v82 = vld [vmem:[#allocation6 + $0x18] sm:$0xf]
    %v83 = vld [vmem:[#allocation6 + $0x1c] sm:$0xf]
    %v84 = vld [vmem:[#allocation2] sm:$0xff]
    %v85 = vld [vmem:[#allocation2 + $0x8] sm:$0xff]
    %v86 = vld [vmem:[#allocation2 + $0x10] sm:$0xff]
    %v87 = vld [vmem:[#allocation2 + $0x18] sm:$0xff]
    %v88 = vld [vmem:[#allocation2 + $0x20] sm:$0x3]
    %v94 = vunpack.c.l.b16 %v71
    %v95 = vunpack.c.l.b16 %v72
    %v96 = vunpack.c.l.b16 %v73
    %v97 = vunpack.c.l.b16 %v74
    %v98 = vunpack.c.l.b16 %v75
    %v99 = vpack.c.b16 %v95, %v94
    %v100 = vpack.c.b16 %v97, %v96
    %v101 = vpack.c.b16 %v98, %v98
    %v110 = vunpack.c.l.b16 %v76
    %v111 = vunpack.c.l.b16 %v77
    %v112 = vunpack.c.l.b16 %v78
    %v113 = vunpack.c.l.b16 %v79
    %v114 = vunpack.c.l.b16 %v80
    %v115 = vunpack.c.l.b16 %v81
    %v116 = vunpack.c.l.b16 %v82
    %v117 = vunpack.c.l.b16 %v83
    %v118 = vpack.c.b16 %v111, %v110
    %v119 = vpack.c.b16 %v113, %v112
    %v120 = vpack.c.b16 %v115, %v114
    %v121 = vpack.c.b16 %v117, %v116
    %vm126 = vcmask 523264
    %v128 = vsel %vm126, %v99, 0
    %v131 = vsel %vm126, %v100, 0
    %v134 = vsel %vm126, %v101, 0
    %136 = vmatprep.subr.bf16.mxu0 0
    %137 = vmatpush1.bf16.msra.mxu0 %v118
    %138 = vmatprep.subr.bf16.mxu0 0
    %139 = vmatpush1.bf16.msra.mxu0 %v119
    %140 = vmatprep.subr.bf16.mxu0 0
    %141 = vmatpush1.bf16.msra.mxu0 %v120
    %142 = vmatprep.subr.bf16.mxu0 0
    %143 = vmatpush1.bf16.msra.mxu0 %v121
    %144 = vmatprep.subr.bf16.mxu0 0
    %145 = vmatpush1.bf16.msra.mxu0 0
    %146 = vmatprep.subr.bf16.mxu0 0
    %147 = vmatpush1.bf16.msra.mxu0 0
    %148 = vmatprep.subr.bf16.mxu0 0
    %149 = vmatpush1.bf16.msra.mxu0 0
    %150 = vmatprep.subr.bf16.mxu0 0
    %151 = vmatpush1.bf16.msra.mxu0 0
    %152 = vmatprep.subr.bf16.mxu0 0
    %153 = vmatpush1.bf16.msra.mxu0 0
    %154 = vmatprep.subr.bf16.mxu0 0
    %155 = vmatpush1.bf16.msra.mxu0 0
    %156 = vmatprep.subr.bf16.mxu0 0
    %157 = vmatpush1.bf16.msra.mxu0 0
    %158 = vmatprep.subr.bf16.mxu0 0
    %159 = vmatpush1.bf16.msra.mxu0 0
    %160 = vmatprep.subr.bf16.mxu0 0
    %161 = vmatpush1.bf16.msra.mxu0 0
    %162 = vmatprep.subr.bf16.mxu0 0
    %163 = vmatpush1.bf16.msra.mxu0 0
    %164 = vmatprep.subr.bf16.mxu0 0
    %165 = vmatpush1.bf16.msra.mxu0 0
    %166 = vmatprep.subr.bf16.mxu0 0
    %167 = vmatpush1.bf16.msra.mxu0 0
    %168 = vmatprep.mubr.bf16.mxu0 0
    %169 = vmatmul.mubr.bf16.gmra.mrb[0].mxu0 %v128
    %v170 = vpop.f32.mrb[0].mxu0
    %v171 = vadd.f32 %v84, %v170
    %v172 = vpop.f32.mrb[0].mxu0
    %v173 = vpop.f32.mrb[0].mxu0
    %v174 = vadd.f32 %v85, %v173
    %v175 = vpop.f32.mrb[0].mxu0
    %176 = vmatprep.mubr.bf16.mxu0 0
    %177 = vmatmul.mubr.bf16.gmra.mrb[0].mxu0 %v131
    %v178 = vpop.f32.mrb[0].mxu0
    %v179 = vadd.f32 %v86, %v178
    %v180 = vpop.f32.mrb[0].mxu0
    %v181 = vpop.f32.mrb[0].mxu0
    %v182 = vadd.f32 %v87, %v181
    %v183 = vpop.f32.mrb[0].mxu0
    %184 = vmatprep.mubr.bf16.mxu0 0
    %185 = vmatmul.mubr.bf16.gmra.mrb[0].mxu0 %v134
    %v186 = vpop.f32.mrb[0].mxu0
    %v187 = vadd.f32 %v88, %v186
    %v188 = vpop.f32.mrb[0].mxu0
    %v189 = vpop.f32.mrb[0].mxu0
    %v190 = vpop.f32.mrb[0].mxu0
    %191 = vdwg.mxu0
    %192 = vst [vmem:[#allocation9] sm:$0xff] %v171
    %193 = vst [vmem:[#allocation9 + $0x8] sm:$0xff] %v174
    %194 = vst [vmem:[#allocation9 + $0x10] sm:$0xff] %v179
    %195 = vst [vmem:[#allocation9 + $0x18] sm:$0xff] %v182
    %196 = vst [vmem:[#allocation9 + $0x20] sm:$0x3] %v187
    // Predicated region
    $region33: #{tpu_custom_call.1} parent=1 // pred_check
      _
    $region34: #{tpu_custom_call.1} parent=1 // pred_check_branch
      %198 = sbr.rel (0) target = $region36
    $region35: #{tpu_custom_call.1} parent=1 // pred_region
      %s200 = ssub.s32 640, 640
      %201 = vsyncadd [#allocation5], %s200
      %s202 = sshll.u32 [#allocation9], 4
      %s203 = int_to_ptr.vmem [resolvable:$true] %s202
      %208 = dma.vmem_to_hbm [thread:$0]  %s203, 640, %s3, [#allocation5], 128, 128, 8
    $region36: #{tpu_custom_call.1} parent=1 // pred_fallthru
      _
    // Predicated region
    $region37: #{tpu_custom_call.1} parent=1 // pred_check
      _
    $region38: #{tpu_custom_call.1} parent=1 // pred_check_branch
      %210 = sbr.rel (0) target = $region40
    $region39: #{tpu_custom_call.1} parent=1 // pred_region
      %211 = dma.done [#allocation5], 640
    $region40: #{tpu_custom_call.1} parent=1 // pred_fallthru
      _
    %212 = vsyncpa [#allocation4], 1
    %213 = vsyncpa [#allocation7], 1
    %214 = vsyncpa [#allocation5], 1

</llo_original>
